<compile_context>
chip_gen: v7x
topology: tpu7x:2x2x1
jax: 0.10.0
libtpu: 0.0.40
codegen_flags: <defaults>
</compile_context>

<pallas_src>
import functools

import jax
import jax.numpy as jnp
from jax.experimental import pallas as pl
from jax.experimental.pallas import tpu as pltpu

_MB = 1024 * 1024
_ROW_CHUNK_BYTES = 2 * _MB   # max f32 bytes of live intermediates per row chunk


def _vmem_plan():
    """Per-generation (input_tile_budget_bytes, vmem_limit_bytes, min_blocks)."""
    try:
        kind = jax.devices()[0].device_kind.lower()
    except Exception:  # defensive: no devices visible at trace time
        kind = ""
    if "v7" in kind:
        # v7x: 64 MiB physical VMEM per TC.  ~40 MiB of double-buffered input
        # tiles + chunk-bounded intermediates fits under a 56 MiB limit with
        # >= 8 MiB headroom for Mosaic internal scratch.  Force >= 2 blocks so
        # the parallel batch axis feeds both TensorCores.
        return 40 * _MB, 56 * _MB, 2
    if "v6" in kind:
        # v6e: 128 MiB physical VMEM -> go big on the batch tile.
        return 48 * _MB, 96 * _MB, 1
    if "v5 lite" in kind or "v5e" in kind or "v5lite" in kind:
        # v5e: 128 MiB physical; the 16 MiB scoped default is overridden by
        # vmem_limit_bytes, so use a healthy tile.
        return 28 * _MB, 56 * _MB, 1
    # Unknown generation: conservative.
    return 16 * _MB, 48 * _MB, 1


def _pick_batch_tile(B, D, itemsize, tile_budget_bytes, min_blocks):
    """Largest batch tile (multiple of 8) whose double-buffered input footprint
    fits the budget; capped only by the budget and by B (no artificial cap)."""
    d_pad = pl.cdiv(D, 128) * 128            # lane-padded width in VMEM
    row_bytes = d_pad * itemsize             # per-row bytes of the input dtype
    tb = int(tile_budget_bytes // (4 * 2 * row_bytes))   # 4 inputs x 2 buffers
    tb = max(8, (tb // 8) * 8)
    if B > tb:
        return tb
    # Whole batch fits in one block.
    if min_blocks > 1:
        split = pl.cdiv(B, min_blocks)
        split = max(8, pl.cdiv(split, 8) * 8)
        if split < B:
            return split                     # >= min_blocks blocks (v7x: 2 TCs)
    return B                                 # single full-array block (legal shape)


def _row_chunk(D, tile_b):
    """Rows per in-kernel chunk so f32 intermediates stay ~<= _ROW_CHUNK_BYTES."""
    d_pad = pl.cdiv(D, 128) * 128
    row_f32_bytes = d_pad * 4
    rc = max(8, (_ROW_CHUNK_BYTES // row_f32_bytes) // 8 * 8)
    return min(rc, max(tile_b, 1))


def _clip_loss_kernel(pa_ref, pb_ref, na_ref, nb_ref, out_ref, *,
                      margin, batch, tile_b, row_chunk, needs_mask):
    """Writes this block's partial sum of relu(neg_sim - pos_sim + margin)."""
    pid = pl.program_id(0)
    block_base = pid * tile_b

    total = jnp.zeros((1, 1), jnp.float32)
    # Static row-chunk loop: bounds live (rows, D) f32 intermediates so the
    # VMEM footprint stays input-buffer dominated even with big batch tiles.
    for r0 in range(0, tile_b, row_chunk):
        r1 = min(r0 + row_chunk, tile_b)
        pa = pa_ref[r0:r1, :].astype(jnp.float32)
        pb = pb_ref[r0:r1, :].astype(jnp.float32)
        na = na_ref[r0:r1, :].astype(jnp.float32)
        nb = nb_ref[r0:r1, :].astype(jnp.float32)

        # Fused: one elementwise diff, one feature-axis (XLU) reduction.
        diff = na * nb - pa * pb                               # (rows, D)
        sim_diff = jnp.sum(diff, axis=1, keepdims=True)        # (rows, 1)
        hinge = jnp.maximum(sim_diff + jnp.float32(margin), 0.0)

        if needs_mask:
            # Ragged last tile: rows >= B contribute exactly zero (also kills
            # any garbage/NaN coming from padded rows of the boundary block).
            row = (jax.lax.broadcasted_iota(jnp.int32, (r1 - r0, 1), 0)
                   + block_base + r0)
            hinge = jnp.where(row < batch, hinge, 0.0)

        total = total + jnp.sum(hinge, axis=0, keepdims=True)  # (1, 1)

    # Per-block partial, broadcast across 128 lanes -> unmasked lane-dense store.
    out_ref[...] = jnp.broadcast_to(total, (1, 128))


def clip_loss(pos_a, pos_b, neg_a, neg_b, margin=0.5, *, tile_b=None):
    """Pallas implementation of CLIPLoss.forward.

    Args:
      pos_a, pos_b: positive pair embeddings, shape (B, D) float32 or bfloat16.
      neg_a, neg_b: negative pair embeddings, shape (B, D), same dtype.
      margin: hinge margin (python float, baked into the kernel).
      tile_b: optional batch-tile override (multiple of 8), mainly for tests.

    Returns:
      scalar float32 loss.
    """
    B, D = pos_a.shape
    assert pos_b.shape == (B, D) and neg_a.shape == (B, D) and neg_b.shape == (B, D)
    dtype = pos_a.dtype
    assert pos_b.dtype == dtype and neg_a.dtype == dtype and neg_b.dtype == dtype
    itemsize = jnp.dtype(dtype).itemsize

    tile_budget, vmem_limit, min_blocks = _vmem_plan()
    if tile_b is None:
        tb = _pick_batch_tile(B, D, itemsize, tile_budget, min_blocks)
    else:
        tb = min(int(tile_b), B)
        assert tb == B or tb % 8 == 0, "tile_b must be a multiple of 8 or == B"
    num_blocks = pl.cdiv(B, tb)
    needs_mask = (B % tb) != 0
    row_chunk = _row_chunk(D, tb)

    in_spec = pl.BlockSpec((tb, D), lambda i: (i, 0))
    kernel = functools.partial(
        _clip_loss_kernel, margin=float(margin), batch=B, tile_b=tb,
        row_chunk=row_chunk, needs_mask=needs_mask)

    partials = pl.pallas_call(
        kernel,
        out_shape=jax.ShapeDtypeStruct((1, num_blocks * 128), jnp.float32),
        grid=(num_blocks,),
        in_specs=[in_spec, in_spec, in_spec, in_spec],
        out_specs=pl.BlockSpec((1, 128), lambda i: (0, i)),
        compiler_params=pltpu.CompilerParams(
            dimension_semantics=("parallel",),   # shards across v7x's 2 TCs
            vmem_limit_bytes=vmem_limit,
        ),
    )(pos_a, pos_b, neg_a, neg_b)

    # Tiny finalize in XLA: one partial per block (lane 0 of each 128-slab),
    # summed and divided by the true batch size.
    per_block = partials.reshape(num_blocks, 128)[:, 0]
    return jnp.sum(per_block) / jnp.float32(B)


def clip_loss_ref(pos_a, pos_b, neg_a, neg_b, margin=0.5):
    """Pure-JAX reference matching the PyTorch module exactly."""
    pos_sim = jnp.sum(pos_a * pos_b, axis=1)
    neg_sim = jnp.sum(neg_a * neg_b, axis=1)
    return jnp.mean(jax.nn.relu(-pos_sim + neg_sim + margin))


if __name__ == "__main__":
    key = jax.random.PRNGKey(0)

    # Case 1: module-sized demo (B=8 embedding pairs, D=32 features).
    B, D = 8, 32
    k1, k2, k3, k4 = jax.random.split(key, 4)
    pos_a = jax.random.normal(k1, (B, D), dtype=jnp.float32)
    pos_b = jax.random.normal(k2, (B, D), dtype=jnp.float32)
    neg_a = jax.random.normal(k3, (B, D), dtype=jnp.float32)
    neg_b = jax.random.normal(k4, (B, D), dtype=jnp.float32)

    loss = jax.block_until_ready(clip_loss(pos_a, pos_b, neg_a, neg_b, margin=0.5))
    ref = jax.block_until_ready(clip_loss_ref(pos_a, pos_b, neg_a, neg_b, margin=0.5))
    assert jnp.allclose(loss, ref, rtol=1e-5, atol=1e-5), (loss, ref)

    # Case 2: exercise the tiled + ragged-last-block + parallel-grid path
    # (B=20 with an 8-row tile -> 3 blocks, last block half-masked).
    B2, D2 = 20, 32
    k5, k6, k7, k8 = jax.random.split(jax.random.PRNGKey(1), 4)
    pa2 = jax.random.normal(k5, (B2, D2), dtype=jnp.float32)
    pb2 = jax.random.normal(k6, (B2, D2), dtype=jnp.float32)
    na2 = jax.random.normal(k7, (B2, D2), dtype=jnp.float32)
    nb2 = jax.random.normal(k8, (B2, D2), dtype=jnp.float32)

    loss2 = jax.block_until_ready(
        clip_loss(pa2, pb2, na2, nb2, margin=0.5, tile_b=8))
    ref2 = jax.block_until_ready(clip_loss_ref(pa2, pb2, na2, nb2, margin=0.5))
    assert jnp.allclose(loss2, ref2, rtol=1e-5, atol=1e-5), (loss2, ref2)

    # Case 3: bf16 inputs (half HBM traffic), default auto tile selection.
    B3, D3 = 24, 256
    k9, k10, k11, k12 = jax.random.split(jax.random.PRNGKey(2), 4)
    pa3 = jax.random.normal(k9, (B3, D3), dtype=jnp.float32).astype(jnp.bfloat16)
    pb3 = jax.random.normal(k10, (B3, D3), dtype=jnp.float32).astype(jnp.bfloat16)
    na3 = jax.random.normal(k11, (B3, D3), dtype=jnp.float32).astype(jnp.bfloat16)
    nb3 = jax.random.normal(k12, (B3, D3), dtype=jnp.float32).astype(jnp.bfloat16)

    loss3 = jax.block_until_ready(clip_loss(pa3, pb3, na3, nb3, margin=0.5))
    ref3 = jax.block_until_ready(clip_loss_ref(
        pa3.astype(jnp.float32), pb3.astype(jnp.float32),
        na3.astype(jnp.float32), nb3.astype(jnp.float32), margin=0.5))
    assert jnp.allclose(loss3, ref3, rtol=1e-4, atol=1e-5), (loss3, ref3)

    print("KERNEL_OK")
</pallas_src>

<mosaic_0001>
module attributes {stable_mosaic.version = 11 : i64} {
  func.func @_clip_loss_kernel(%arg0: i32, %arg1: memref<8x32xf32, #tpu.memory_space<vmem>>, %arg2: memref<8x32xf32, #tpu.memory_space<vmem>>, %arg3: memref<8x32xf32, #tpu.memory_space<vmem>>, %arg4: memref<8x32xf32, #tpu.memory_space<vmem>>, %arg5: memref<1x128xf32, #tpu.memory_space<vmem>>) attributes {dimension_semantics = [#tpu.dimension_semantics<parallel>], iteration_bounds = array<i64: 1>, scalar_prefetch = 0 : i64, scratch_operands = 0 : i64, tpu.core_type = #tpu.core_type<tc>, window_params = [{transform_indices = @transform_0, window_bounds = array<i64: 8, 32>}, {transform_indices = @transform_1, window_bounds = array<i64: 8, 32>}, {transform_indices = @transform_2, window_bounds = array<i64: 8, 32>}, {transform_indices = @transform_3, window_bounds = array<i64: 8, 32>}, {transform_indices = @transform_4, window_bounds = array<i64: 1, 128>}]} {
    %cst = arith.constant 0.000000e+00 : f32
    %0 = vector.broadcast %cst : f32 to vector<1x1xf32>
    %c0 = arith.constant 0 : index
    %c0_0 = arith.constant 0 : index
    %1 = vector.load %arg1[%c0, %c0_0] : memref<8x32xf32, #tpu.memory_space<vmem>>, vector<8x32xf32>
    %c0_1 = arith.constant 0 : index
    %c0_2 = arith.constant 0 : index
    %2 = vector.load %arg2[%c0_1, %c0_2] : memref<8x32xf32, #tpu.memory_space<vmem>>, vector<8x32xf32>
    %c0_3 = arith.constant 0 : index
    %c0_4 = arith.constant 0 : index
    %3 = vector.load %arg3[%c0_3, %c0_4] : memref<8x32xf32, #tpu.memory_space<vmem>>, vector<8x32xf32>
    %c0_5 = arith.constant 0 : index
    %c0_6 = arith.constant 0 : index
    %4 = vector.load %arg4[%c0_5, %c0_6] : memref<8x32xf32, #tpu.memory_space<vmem>>, vector<8x32xf32>
    %5 = arith.mulf %3, %4 : vector<8x32xf32>
    %6 = arith.mulf %1, %2 : vector<8x32xf32>
    %7 = arith.subf %5, %6 : vector<8x32xf32>
    %cst_7 = arith.constant dense<0.000000e+00> : vector<8xf32>
    %8 = vector.multi_reduction <add>, %7, %cst_7 [1] : vector<8x32xf32> to vector<8xf32>
    %9 = vector.shape_cast %8 : vector<8xf32> to vector<8x1xf32>
    %cst_8 = arith.constant 5.000000e-01 : f32
    %10 = vector.broadcast %cst_8 : f32 to vector<8x1xf32>
    %11 = arith.addf %9, %10 : vector<8x1xf32>
    %cst_9 = arith.constant 0.000000e+00 : f32
    %12 = vector.broadcast %cst_9 : f32 to vector<8x1xf32>
    %13 = arith.maximumf %11, %12 : vector<8x1xf32>
    %cst_10 = arith.constant dense<0.000000e+00> : vector<1xf32>
    %14 = vector.multi_reduction <add>, %13, %cst_10 [0] : vector<8x1xf32> to vector<1xf32>
    %15 = vector.shape_cast %14 : vector<1xf32> to vector<1x1xf32>
    %16 = arith.addf %0, %15 : vector<1x1xf32>
    %17 = vector.shape_cast %16 : vector<1x1xf32> to vector<1x1xf32>
    %18 = vector.broadcast %17 : vector<1x1xf32> to vector<1x128xf32>
    %c0_11 = arith.constant 0 : index
    %c0_12 = arith.constant 0 : index
    %19 = vector.load %arg5[%c0_11, %c0_12] : memref<1x128xf32, #tpu.memory_space<vmem>>, vector<1x128xf32>
    tpu.vector_store %arg5[%c0_11, %c0_12], %18 {strides = array<i32>} : memref<1x128xf32, #tpu.memory_space<vmem>>, vector<1x128xf32>,
    return
  }
  func.func @transform_0(%arg0: i32) -> (i32, i32) {
    %c0_i32 = arith.constant 0 : i32
    %c0_i32_0 = arith.constant 0 : i32
    return %arg0, %c0_i32 : i32, i32
  }
  func.func @transform_1(%arg0: i32) -> (i32, i32) {
    %c0_i32 = arith.constant 0 : i32
    %c0_i32_0 = arith.constant 0 : i32
    return %arg0, %c0_i32 : i32, i32
  }
  func.func @transform_2(%arg0: i32) -> (i32, i32) {
    %c0_i32 = arith.constant 0 : i32
    %c0_i32_0 = arith.constant 0 : i32
    return %arg0, %c0_i32 : i32, i32
  }
  func.func @transform_3(%arg0: i32) -> (i32, i32) {
    %c0_i32 = arith.constant 0 : i32
    %c0_i32_0 = arith.constant 0 : i32
    return %arg0, %c0_i32 : i32, i32
  }
  func.func @transform_4(%arg0: i32) -> (i32, i32) {
    %c0_i32 = arith.constant 0 : i32
    %c0_i32_0 = arith.constant 0 : i32
    return %c0_i32, %arg0 : i32, i32
  }
}

</mosaic_0001>

<llo_original>
// kernel: tpu_custom_call.1
$region0: #{tpu_custom_call.1}
  #allocation0 [shape = 'u32[]', space=smem, size = 0x4, offset = 0x4, fixed_abs, tag = 'smem constant byte address 0x4 - core index']
  #allocation1 [shape = 'u32[144,128]{1,0:T(1,128)}', space=vmem, size = 0x12000, scoped, tag = 'internal scratch']
  %s0 = inlined_call_operand.hbm [shape: f32[8,32], index: 0, kind: input, shape index: {}]
  %s1 = inlined_call_operand.hbm [shape: f32[8,32], index: 1, kind: input, shape index: {}]
  %s2 = inlined_call_operand.hbm [shape: f32[8,32], index: 2, kind: input, shape index: {}]
  %s3 = inlined_call_operand.vmem [shape: f32[8,32], index: 3, kind: input, shape index: {}]
  %s4 = inlined_call_operand.hbm [shape: f32[1,128], index: 4, kind: output, shape index: {}]
  %s5 = sld [smem:[#allocation0]]
  $region38: #{tpu_custom_call.1} parent=0
    _
  %s7 = ssub.s32 1, %s5
  %s8 = scalar_select 0, %s7, %s5
  $region1: #{tpu_custom_call.1} parent=0
    #allocation2 [shape = 'u8[4096]{0}', space=vmem, size = 0x1000, scoped, tag = 'input window, operand 0, single buffered']
    #allocation3 [shape = 's32[1]{0}', space=sflag, size = 0x4, scoped, tag = 'scoped memory for tpu_custom_call.1']
    #allocation4 [shape = 's32[1]{0}', space=sflag, size = 0x4, scoped, tag = 'scoped memory for tpu_custom_call.1']
    #allocation5 [shape = 'u8[4096]{0}', space=vmem, size = 0x1000, scoped, tag = 'input window, operand 1, single buffered']
    #allocation6 [shape = 's32[1]{0}', space=sflag, size = 0x4, scoped, tag = 'scoped memory for tpu_custom_call.1']
    #allocation7 [shape = 'u8[4096]{0}', space=vmem, size = 0x1000, scoped, tag = 'input window, operand 2, single buffered']
    #allocation8 [shape = 'u8[512]{0}', space=vmem, size = 0x400, scoped, tag = 'output window, operand 0, single buffered']
    %9 = vsyncpa [#allocation3], 0
    %10 = vsyncpa [#allocation6], 0
    %11 = vsyncpa [#allocation4], 0
    // Predicated region
    $region2: #{tpu_custom_call.1} parent=1 // pred_check
      _
    $region3: #{tpu_custom_call.1} parent=1 // pred_check_branch
      %13 = sbr.rel (0) target = $region5
    $region4: #{tpu_custom_call.1} parent=1 // pred_region
      %s15 = ssub.s32 128, 128
      %16 = vsyncadd [#allocation3], %s15
      %s18 = sshll.u32 [#allocation2], 4
      %s19 = int_to_ptr.vmem [resolvable:$true] %s18
      %21 = dma.hbm_to_vmem [thread:$0]  %s0, 128, %s19, [#allocation3]
    $region5: #{tpu_custom_call.1} parent=1 // pred_fallthru
      _
    // Predicated region
    $region6: #{tpu_custom_call.1} parent=1 // pred_check
      _
    $region7: #{tpu_custom_call.1} parent=1 // pred_check_branch
      %23 = sbr.rel (0) target = $region9
    $region8: #{tpu_custom_call.1} parent=1 // pred_region
      %s25 = ssub.s32 128, 128
      %26 = vsyncadd [#allocation6], %s25
      %s28 = sshll.u32 [#allocation5], 4
      %s29 = int_to_ptr.vmem [resolvable:$true] %s28
      %31 = dma.hbm_to_vmem [thread:$0]  %s1, 128, %s29, [#allocation6]
    $region9: #{tpu_custom_call.1} parent=1 // pred_fallthru
      _
    // Predicated region
    $region10: #{tpu_custom_call.1} parent=1 // pred_check
      _
    $region11: #{tpu_custom_call.1} parent=1 // pred_check_branch
      %33 = sbr.rel (0) target = $region13
    $region12: #{tpu_custom_call.1} parent=1 // pred_region
      %s35 = ssub.s32 128, 128
      %36 = vsyncadd [#allocation6], %s35
      %s38 = sshll.u32 [#allocation7], 4
      %s39 = int_to_ptr.vmem [resolvable:$true] %s38
      %41 = dma.hbm_to_vmem [thread:$0]  %s2, 128, %s39, [#allocation6]
    $region13: #{tpu_custom_call.1} parent=1 // pred_fallthru
      _
    // Predicated region
    $region14: #{tpu_custom_call.1} parent=1 // pred_check
      _
    $region15: #{tpu_custom_call.1} parent=1 // pred_check_branch
      %43 = sbr.rel (0) target = $region17
    $region16: #{tpu_custom_call.1} parent=1 // pred_region
      _
    $region17: #{tpu_custom_call.1} parent=1 // pred_fallthru
      _
    // Predicated region
    $region18: #{tpu_custom_call.1} parent=1 // pred_check
      _
    $region19: #{tpu_custom_call.1} parent=1 // pred_check_branch
      %45 = sbr.rel (0) target = $region21
    $region20: #{tpu_custom_call.1} parent=1 // pred_region
      %46 = dma.done [#allocation3], 128
    $region21: #{tpu_custom_call.1} parent=1 // pred_fallthru
      _
    // Predicated region
    $region22: #{tpu_custom_call.1} parent=1 // pred_check
      _
    $region23: #{tpu_custom_call.1} parent=1 // pred_check_branch
      %48 = sbr.rel (0) target = $region25
    $region24: #{tpu_custom_call.1} parent=1 // pred_region
      %49 = dma.done [#allocation6], 128
    $region25: #{tpu_custom_call.1} parent=1 // pred_fallthru
      _
    // Predicated region
    $region26: #{tpu_custom_call.1} parent=1 // pred_check
      _
    $region27: #{tpu_custom_call.1} parent=1 // pred_check_branch
      %51 = sbr.rel (0) target = $region29
    $region28: #{tpu_custom_call.1} parent=1 // pred_region
      %52 = dma.done [#allocation6], 128
    $region29: #{tpu_custom_call.1} parent=1 // pred_fallthru
      _
    %v53 = vld [vmem:[#allocation2] sm:$0xff]
    %v54 = vld [vmem:[#allocation5] sm:$0xff]
    %v55 = vld [vmem:[#allocation7] sm:$0xff]
    %v56 = vld [vmem:[%s3] sm:$0xff]
    %v57 = vmul.f32 %v55, %v56
    %v58 = vmul.f32 %v53, %v54
    %v59 = vsub.f32 %v57, %v58
    %vm60 = vcmask 261120
    %v61 = vsel %vm60, %v59, 0.0
    %62 = vadd.xlane.f32.xlu0 %v61
    %v63 = vpop.xlane.xlu0 %62
    %v64 = vadd.f32 %v63, 0.5
    %v65 = vmax.f32 %v64, 0.0
    %v66 = vrot.slane %v65, 4
    %v67 = vadd.f32 %v65, %v66
    %v68 = vrot.slane %v67, 2
    %v69 = vadd.f32 %v67, %v68
    %v70 = vrot.slane %v69, 1
    %v71 = vadd.f32 %v69, %v70
    %v72 = vadd.f32 %v71, 0.0
    %73 = vst [vmem:[#allocation8] sm:$0x1] %v72
    // Predicated region
    $region30: #{tpu_custom_call.1} parent=1 // pred_check
      _
    $region31: #{tpu_custom_call.1} parent=1 // pred_check_branch
      %75 = sbr.rel (0) target = $region33
    $region32: #{tpu_custom_call.1} parent=1 // pred_region
      %s77 = ssub.s32 16, 16
      %78 = vsyncadd [#allocation4], %s77
      %s80 = sshll.u32 [#allocation8], 4
      %s81 = int_to_ptr.vmem [resolvable:$true] %s80
      %83 = dma.vmem_to_hbm [thread:$0]  %s81, 16, %s4, [#allocation4]
    $region33: #{tpu_custom_call.1} parent=1 // pred_fallthru
      _
    // Predicated region
    $region34: #{tpu_custom_call.1} parent=1 // pred_check
      _
    $region35: #{tpu_custom_call.1} parent=1 // pred_check_branch
      %85 = sbr.rel (0) target = $region37
    $region36: #{tpu_custom_call.1} parent=1 // pred_region
      %86 = dma.done [#allocation4], 16
    $region37: #{tpu_custom_call.1} parent=1 // pred_fallthru
      _
    %87 = vsyncpa [#allocation3], 1
    %88 = vsyncpa [#allocation6], 1
    %89 = vsyncpa [#allocation4], 1

</llo_original>
